<compile_context>
chip_gen: v7x
topology: tpu7x:2x2x1
jax: 0.10.0
libtpu: 0.0.40
codegen_flags: <defaults>
</compile_context>

<pallas_src>
import jax
import jax.numpy as jnp
from jax.experimental import pallas as pl
from jax.experimental.pallas import tpu as pltpu


# ------------------------------ helpers ---------------------------------------

def _pick_tile(dim, pref, align=1):
    """Largest divisor of `dim` that is <= `pref` and a multiple of `align`.

    If `dim <= pref` the full dim is returned (full-extent blocks always satisfy
    the TPU (8, 128) layout rule).  If no aligned divisor <= `pref` exists we
    fall back to the full dim (correct, just unbudgeted) rather than emit an
    unaligned tile Mosaic would reject.
    """
    if dim <= pref:
        return dim
    for c in range(pref, align - 1, -1):
        if dim % c == 0 and c % align == 0:
            return c
    return dim


def _pick_head_group(heads, max_group=4):
    """Largest divisor of `heads` <= max_group (heads batched per grid step)."""
    for c in range(min(heads, max_group), 0, -1):
        if heads % c == 0:
            return c
    return 1


def _vmem_limit(est_bytes):
    """Explicit scoped-VMEM budget: 2x headroom, clamped to [32 MiB, 64 MiB].

    64 MiB is v7x physical VMEM; v5e/v6e have 128 MiB so the cap is safe there.
    """
    return int(min(64 << 20, max(32 << 20, 2 * est_bytes)))


# ----------------------------- linear kernel ----------------------------------

def _linear_kernel(x_ref, w_ref, o_ref, acc_ref):
    k = pl.program_id(2)

    @pl.when(k == 0)
    def _():
        acc_ref[...] = jnp.zeros_like(acc_ref)

    acc_ref[...] += jnp.dot(x_ref[...], w_ref[...],
                            preferred_element_type=jnp.float32)

    @pl.when(k == pl.num_programs(2) - 1)
    def _():
        o_ref[...] = acc_ref[...].astype(o_ref.dtype)


def pallas_linear(x2d, w, *, out_dtype=None, tm=256, tn=512, tk=512):
    """x2d: (rows, Din) @ w: (Din, Dout) -> (rows, Dout), no bias.

    Operands are expected to already be bf16 (halves HBM streaming); the MXU
    accumulates in f32 and the result is emitted in `out_dtype`.
    """
    rows, din = x2d.shape
    dout = w.shape[1]
    out_dtype = out_dtype if out_dtype is not None else x2d.dtype
    tm = _pick_tile(rows, tm, 8)
    tn = _pick_tile(dout, tn, 128)
    tk = _pick_tile(din, tk, 128)
    grid = (rows // tm, dout // tn, din // tk)

    isz = jnp.dtype(x2d.dtype).itemsize
    osz = jnp.dtype(out_dtype).itemsize
    est = 2 * isz * (tm * tk + tk * tn) + 2 * osz * tm * tn + 4 * tm * tn
    cost = pl.CostEstimate(
        flops=2 * rows * din * dout,
        transcendentals=0,
        bytes_accessed=isz * (rows * din + din * dout) + osz * rows * dout,
    )

    return pl.pallas_call(
        _linear_kernel,
        out_shape=jax.ShapeDtypeStruct((rows, dout), out_dtype),
        grid_spec=pltpu.PrefetchScalarGridSpec(
            num_scalar_prefetch=0,
            grid=grid,
            in_specs=[pl.BlockSpec((tm, tk), lambda i, j, k: (i, k)),
                      pl.BlockSpec((tk, tn), lambda i, j, k: (k, j))],
            out_specs=pl.BlockSpec((tm, tn), lambda i, j, k: (i, j)),
            scratch_shapes=[pltpu.VMEM((tm, tn), jnp.float32)],
        ),
        compiler_params=pltpu.CompilerParams(
            dimension_semantics=("parallel", "parallel", "arbitrary"),
            vmem_limit_bytes=_vmem_limit(est)),
        cost_estimate=cost,
    )(x2d, w)


# ------------------------- flash attention kernel ------------------------------

def _flash_attn_kernel(q_ref, k_ref, v_ref, o_ref, m_scr, l_scr, acc_scr):
    kv_idx = pl.program_id(2)

    @pl.when(kv_idx == 0)
    def _():
        m_scr[...] = jnp.full_like(m_scr, -jnp.inf)
        l_scr[...] = jnp.zeros_like(l_scr)
        acc_scr[...] = jnp.zeros_like(acc_scr)

    # q is bf16 and pre-scaled (1/sqrt(d) folded into Wq in the wrapper),
    # so no per-KV-step VALU work on the q block.
    q = q_ref[0]                                    # (G, tq, d) bf16
    k = k_ref[0]                                    # (G, tk, d) bf16
    v = v_ref[0]                                    # (G, tk, d) bf16

    # sim = q @ k^T batched over the head group; f32 accumulation on the MXU.
    sim = jnp.einsum("gqd,gkd->gqk", q, k,
                     preferred_element_type=jnp.float32)       # (G, tq, tk)

    m_prev = m_scr[...]                                         # (G, tq, 1)
    m_new = jnp.maximum(m_prev, jnp.max(sim, axis=-1, keepdims=True))
    alpha = jnp.exp(m_prev - m_new)                             # (G, tq, 1)
    p = jnp.exp(sim - m_new)                                    # (G, tq, tk) f32
    l_scr[...] = alpha * l_scr[...] + jnp.sum(p, axis=-1, keepdims=True)
    acc_scr[...] = alpha * acc_scr[...] + jnp.einsum(
        "gqk,gkd->gqd", p.astype(v.dtype), v,
        preferred_element_type=jnp.float32)
    m_scr[...] = m_new

    @pl.when(kv_idx == pl.num_programs(2) - 1)
    def _():
        inv_l = pl.reciprocal(l_scr[...], approx=True)   # EUP slot, not VALU
        o_ref[0] = (acc_scr[...] * inv_l).astype(o_ref.dtype)


def pallas_flash_attention(q, k, v, *, block_q=512, block_k=1024,
                           kv_resident=None, kv_resident_budget=8 << 20):
    """q: (BHG, G, N, d); k, v: (BHG, G, M, d) -> (BHG, G, N, d).

    G heads are batched per grid step.  When the full K/V for one head group
    fits `kv_resident_budget` (double-buffered), block_k = M so the K/V block
    index is independent of the query tile and K/V are DMA'd once per head
    group instead of once per query tile.
    """
    bhg, g, n, d = q.shape
    m = k.shape[2]
    isz = jnp.dtype(k.dtype).itemsize

    tq = _pick_tile(n, block_q, 8)
    if kv_resident is None:
        kv_resident = (2 * 2 * g * m * d * isz) <= kv_resident_budget
    tk = m if kv_resident else _pick_tile(m, block_k, 8)
    grid = (bhg, n // tq, m // tk)

    est = (2 * isz * (2 * g * tq * d + 2 * g * tk * d)
           + 4 * g * tq * (d + 2))
    cost = pl.CostEstimate(
        flops=4 * bhg * g * n * m * d,
        transcendentals=bhg * g * n * m,
        bytes_accessed=isz * (2 * int(q.size) + int(k.size) + int(v.size)),
    )

    return pl.pallas_call(
        _flash_attn_kernel,
        out_shape=jax.ShapeDtypeStruct((bhg, g, n, d), q.dtype),
        grid_spec=pltpu.PrefetchScalarGridSpec(
            num_scalar_prefetch=0,
            grid=grid,
            in_specs=[
                pl.BlockSpec((1, g, tq, d), lambda b, i, j: (b, 0, i, 0)),
                pl.BlockSpec((1, g, tk, d), lambda b, i, j: (b, 0, j, 0)),
                pl.BlockSpec((1, g, tk, d), lambda b, i, j: (b, 0, j, 0)),
            ],
            out_specs=pl.BlockSpec((1, g, tq, d), lambda b, i, j: (b, 0, i, 0)),
            scratch_shapes=[
                pltpu.VMEM((g, tq, 1), jnp.float32),   # running max
                pltpu.VMEM((g, tq, 1), jnp.float32),   # running denom
                pltpu.VMEM((g, tq, d), jnp.float32),   # unnormalized output acc
            ],
        ),
        compiler_params=pltpu.CompilerParams(
            dimension_semantics=("parallel", "parallel", "arbitrary"),
            vmem_limit_bytes=_vmem_limit(est)),
        cost_estimate=cost,
    )(q, k, v)


# -------------------- fused head-merge + output projection ---------------------

def _merge_out_kernel(oh_ref, w_ref, b_ref, o_ref):
    n_heads = oh_ref.shape[1]
    acc = jnp.dot(oh_ref[0, 0], w_ref[0], preferred_element_type=jnp.float32)
    for h in range(1, n_heads):          # static loop; H is small
        acc = acc + jnp.dot(oh_ref[0, h], w_ref[h],
                            preferred_element_type=jnp.float32)
    o_ref[0] = (acc + b_ref[...].astype(jnp.float32)).astype(o_ref.dtype)


def pallas_merge_out_proj(oh, wo3, bo2, out_dtype, *, tm=256, tn=512):
    """Fused '(b h) n d -> b n (h d)' merge + output projection + bias.

    oh: (B, H, N, d) bf16 (head-major flash output), wo3: (H, d, Dq) bf16,
    bo2: (1, Dq) f32 -> (B, N, Dq).  The head merge is expressed as a sum over
    H of (tm, d) @ (d, tn) partials, so the transpose back to feature-major
    layout never touches HBM and the final store is lane-dense (Dq wide).
    """
    b, h, n, d = oh.shape
    dq = wo3.shape[2]
    tm = _pick_tile(n, tm, 8)
    tn = _pick_tile(dq, tn, 128)
    grid = (b, n // tm, dq // tn)

    isz = jnp.dtype(oh.dtype).itemsize
    osz = jnp.dtype(out_dtype).itemsize
    est = 2 * isz * (h * tm * d + h * d * tn) + 2 * 4 * tn + 2 * osz * tm * tn
    cost = pl.CostEstimate(
        flops=2 * b * n * h * d * dq,
        transcendentals=0,
        bytes_accessed=isz * (int(oh.size) + int(wo3.size)) + osz * b * n * dq,
    )

    return pl.pallas_call(
        _merge_out_kernel,
        out_shape=jax.ShapeDtypeStruct((b, n, dq), out_dtype),
        grid_spec=pltpu.PrefetchScalarGridSpec(
            num_scalar_prefetch=0,
            grid=grid,
            in_specs=[
                pl.BlockSpec((1, h, tm, d), lambda bi, i, j: (bi, 0, i, 0)),
                pl.BlockSpec((h, d, tn), lambda bi, i, j: (0, 0, j)),
                pl.BlockSpec((1, tn), lambda bi, i, j: (0, j)),
            ],
            out_specs=pl.BlockSpec((1, tm, tn), lambda bi, i, j: (bi, i, j)),
        ),
        compiler_params=pltpu.CompilerParams(
            dimension_semantics=("parallel", "parallel", "parallel"),
            vmem_limit_bytes=_vmem_limit(est)),
        cost_estimate=cost,
    )(oh, wo3, bo2)


# ------------------------------- JAX wrapper -----------------------------------

def attention_forward(x, params, context=None, heads=8, dim_head=64,
                      block_q=512, block_k=1024, kv_resident=None):
    """Full Attention.forward. x: (B, N, Dq), context: (B, M, Dc) or None."""
    b, n, dq = x.shape
    ctx = x if context is None else context
    m, dc = ctx.shape[1], ctx.shape[2]
    inner = heads * dim_head
    scale = dim_head ** (-0.5)

    # Fold 1/sqrt(d) into Wq (f32), then cast weights/activations to bf16 once:
    # halves HBM traffic for projection writeback, the head-split transposes
    # and K/V streaming; matmuls still accumulate in f32.
    wq = (params["wq"] * scale).astype(jnp.bfloat16)            # (dq, inner)
    wkv = params["wkv"].astype(jnp.bfloat16)                    # (dc, 2*inner)
    wo3 = params["wo"].reshape(heads, dim_head, dq).astype(jnp.bfloat16)
    bo2 = params["bo"].reshape(1, dq).astype(jnp.float32)

    xb = x.astype(jnp.bfloat16)
    if context is None:
        # Self-attention: fused QKV projection — one pass over x, one kernel.
        wqkv = jnp.concatenate([wq, wkv], axis=1)               # (dq, 3*inner)
        qkv = pallas_linear(xb.reshape(b * n, dq), wqkv).reshape(b, n, 3 * inner)
        q = qkv[..., :inner]
        k = qkv[..., inner:2 * inner]
        v = qkv[..., 2 * inner:]
    else:
        cb = ctx.astype(jnp.bfloat16)
        q = pallas_linear(xb.reshape(b * n, dq), wq).reshape(b, n, inner)
        kv = pallas_linear(cb.reshape(b * m, dc), wkv).reshape(b, m, 2 * inner)
        k, v = kv[..., :inner], kv[..., inner:]

    # 'b n (h d) -> (b h/g) g n d' — XLA transpose on bf16 data.
    g = _pick_head_group(heads)

    def split_heads(t, length):
        return (t.reshape(b, length, heads, dim_head)
                 .transpose(0, 2, 1, 3)
                 .reshape(b * heads // g, g, length, dim_head))

    qh = split_heads(q, n)
    kh = split_heads(k, m)
    vh = split_heads(v, m)

    # Flash attention core (online softmax over tiled / resident KV axis).
    oh = pallas_flash_attention(qh, kh, vh, block_q=block_q, block_k=block_k,
                                kv_resident=kv_resident)
    oh = oh.reshape(b, heads, n, dim_head)                      # free reshape

    # '(b h) n d -> b n (h d)' merge fused into the bias output projection.
    return pallas_merge_out_proj(oh, wo3, bo2, x.dtype)


# --------------------------- reference (pure JAX) -------------------------------

def attention_reference(x, params, context=None, heads=8, dim_head=64):
    b, n, dq = x.shape
    ctx = x if context is None else context
    inner = heads * dim_head
    scale = dim_head ** (-0.5)
    q = x @ params["wq"]
    kv = ctx @ params["wkv"]
    k, v = kv[..., :inner], kv[..., inner:]

    def sh(t):
        return t.reshape(t.shape[0], t.shape[1], heads, dim_head).transpose(0, 2, 1, 3)

    qh, kh, vh = sh(q), sh(k), sh(v)                            # (B, H, *, d)
    sim = jnp.einsum("bhid,bhjd->bhij", qh, kh) * scale
    attn = jax.nn.softmax(sim, axis=-1)
    oh = jnp.einsum("bhij,bhjd->bhid", attn, vh)
    out = oh.transpose(0, 2, 1, 3).reshape(b, n, inner)
    return out @ params["wo"] + params["bo"]


# ------------------------------------ main --------------------------------------

if __name__ == "__main__":
    B, N, M = 2, 8, 16
    query_dim, context_dim = 32, 24
    heads, dim_head = 2, 64
    inner = heads * dim_head

    key = jax.random.PRNGKey(0)
    kx, kc, k1, k2, k3, k4, k5 = jax.random.split(key, 7)

    x = jax.random.normal(kx, (B, N, query_dim), dtype=jnp.float32)
    context = jax.random.normal(kc, (B, M, context_dim), dtype=jnp.float32)

    # Cross-attention module instance (explicit context_dim).
    params_cross = {
        "wq": 0.05 * jax.random.normal(k1, (query_dim, inner), jnp.float32),
        "wkv": 0.05 * jax.random.normal(k2, (context_dim, 2 * inner), jnp.float32),
        "wo": 0.05 * jax.random.normal(k3, (inner, query_dim), jnp.float32),
        "bo": 0.01 * jax.random.normal(k4, (query_dim,), jnp.float32),
    }
    # Self-attention module instance (context_dim defaults to query_dim).
    params_self = dict(params_cross)
    params_self["wkv"] = 0.05 * jax.random.normal(
        k5, (query_dim, 2 * inner), jnp.float32)

    # Cross-attention path; block_k=8 + kv_resident=False forces 2 KV tiles ->
    # exercises the online-softmax accumulation across grid steps.
    out = attention_forward(x, params_cross, context=context, heads=heads,
                            dim_head=dim_head, block_k=8, kv_resident=False)
    out = jax.block_until_ready(out)
    ref = attention_reference(x, params_cross, context=context, heads=heads,
                              dim_head=dim_head)
    assert out.shape == (B, N, query_dim), out.shape
    err = jnp.max(jnp.abs(out - ref))
    # bf16 activation/weight storage + approx reciprocal + bf16 p for the AV
    # matmul -> loosened tolerance vs the f32 reference (inference setting).
    assert jnp.allclose(out, ref, atol=3e-2, rtol=3e-2), f"max abs err {err}"

    # Self-attention path (context=None): fused QKV projection + KV-resident
    # flash attention.
    out_self = attention_forward(x, params_self, context=None, heads=heads,
                                 dim_head=dim_head)
    out_self = jax.block_until_ready(out_self)
    ref_self = attention_reference(x, params_self, context=None, heads=heads,
                                   dim_head=dim_head)
    err_self = jnp.max(jnp.abs(out_self - ref_self))
    assert jnp.allclose(out_self, ref_self, atol=3e-2, rtol=3e-2), \
        f"max abs err {err_self}"

    print("KERNEL_OK")
</pallas_src>

<mosaic_0001>
module attributes {stable_mosaic.version = 11 : i64} {
  func.func @_linear_kernel(%arg0: i32, %arg1: i32, %arg2: i32, %arg3: memref<16x32xbf16, #tpu.memory_space<vmem>>, %arg4: memref<32x128xbf16, #tpu.memory_space<vmem>>, %arg5: memref<16x128xbf16, #tpu.memory_space<vmem>>, %arg6: memref<16x128xf32, #tpu.memory_space<vmem>>) attributes {dimension_semantics = [#tpu.dimension_semantics<parallel>, #tpu.dimension_semantics<parallel>, #tpu.dimension_semantics<arbitrary>], iteration_bounds = array<i64: 1, 1, 1>, scalar_prefetch = 0 : i64, scratch_operands = 1 : i64, tpu.core_type = #tpu.core_type<tc>, window_params = [{transform_indices = @transform_0, window_bounds = array<i64: 16, 32>}, {transform_indices = @transform_1, window_bounds = array<i64: 32, 128>}, {transform_indices = @transform_2, window_bounds = array<i64: 16, 128>}]} {
    %c0_i32 = arith.constant 0 : i32
    %0 = arith.cmpi eq, %arg2, %c0_i32 : i32
    %1 = arith.extui %0 : i1 to i32
    %c0_i32_0 = arith.constant 0 : i32
    %2 = arith.cmpi ne, %1, %c0_i32_0 : i32
    scf.if %2 {
      %cst_10 = arith.constant 0.000000e+00 : f32
      %12 = vector.broadcast %cst_10 : f32 to vector<16x128xf32>
      %c0_11 = arith.constant 0 : index
      %c0_12 = arith.constant 0 : index
      %13 = vector.load %arg6[%c0_11, %c0_12] : memref<16x128xf32, #tpu.memory_space<vmem>>, vector<16x128xf32>
      tpu.vector_store %arg6[%c0_11, %c0_12], %12 {strides = array<i32>} : memref<16x128xf32, #tpu.memory_space<vmem>>, vector<16x128xf32>,
    } else {
    }
    %c0 = arith.constant 0 : index
    %c0_1 = arith.constant 0 : index
    %3 = vector.load %arg6[%c0, %c0_1] : memref<16x128xf32, #tpu.memory_space<vmem>>, vector<16x128xf32>
    %c0_2 = arith.constant 0 : index
    %c0_3 = arith.constant 0 : index
    %4 = vector.load %arg3[%c0_2, %c0_3] : memref<16x32xbf16, #tpu.memory_space<vmem>>, vector<16x32xbf16>
    %c0_4 = arith.constant 0 : index
    %c0_5 = arith.constant 0 : index
    %5 = vector.load %arg4[%c0_4, %c0_5] : memref<32x128xbf16, #tpu.memory_space<vmem>>, vector<32x128xbf16>
    %cst = arith.constant dense<0.000000e+00> : vector<16x128xf32>
    %6 = tpu.matmul %4, %5, %cst {dimension_numbers = #tpu.dot_dimension_numbers<[1], [0], [0], [1], [0, 0, 1, 1], [], []>} : vector<16x32xbf16>, vector<32x128xbf16>, vector<16x128xf32> -> vector<16x128xf32>
    %7 = arith.addf %3, %6 : vector<16x128xf32>
    %c0_6 = arith.constant 0 : index
    %c0_7 = arith.constant 0 : index
    %8 = vector.load %arg6[%c0_6, %c0_7] : memref<16x128xf32, #tpu.memory_space<vmem>>, vector<16x128xf32>
    tpu.vector_store %arg6[%c0_6, %c0_7], %7 {strides = array<i32>} : memref<16x128xf32, #tpu.memory_space<vmem>>, vector<16x128xf32>,
    %c0_i32_8 = arith.constant 0 : i32
    %9 = arith.cmpi eq, %arg2, %c0_i32_8 : i32
    %10 = arith.extui %9 : i1 to i32
    %c0_i32_9 = arith.constant 0 : i32
    %11 = arith.cmpi ne, %10, %c0_i32_9 : i32
    scf.if %11 {
      %c0_10 = arith.constant 0 : index
      %c0_11 = arith.constant 0 : index
      %12 = vector.load %arg6[%c0_10, %c0_11] : memref<16x128xf32, #tpu.memory_space<vmem>>, vector<16x128xf32>
      %13 = arith.truncf %12 : vector<16x128xf32> to vector<16x128xbf16>
      %c0_12 = arith.constant 0 : index
      %c0_13 = arith.constant 0 : index
      %14 = vector.load %arg5[%c0_12, %c0_13] : memref<16x128xbf16, #tpu.memory_space<vmem>>, vector<16x128xbf16>
      tpu.vector_store %arg5[%c0_12, %c0_13], %13 {strides = array<i32>} : memref<16x128xbf16, #tpu.memory_space<vmem>>, vector<16x128xbf16>,
    } else {
    }
    return
  }
  func.func @transform_0(%arg0: i32, %arg1: i32, %arg2: i32) -> (i32, i32) {
    %c0_i32 = arith.constant 0 : i32
    return %arg0, %arg2 : i32, i32
  }
  func.func @transform_1(%arg0: i32, %arg1: i32, %arg2: i32) -> (i32, i32) {
    %c0_i32 = arith.constant 0 : i32
    return %arg2, %arg1 : i32, i32
  }
  func.func @transform_2(%arg0: i32, %arg1: i32, %arg2: i32) -> (i32, i32) {
    %c0_i32 = arith.constant 0 : i32
    return %arg0, %arg1 : i32, i32
  }
}

</mosaic_0001>

<llo_original>
// kernel: tpu_custom_call.1
$region0: #{tpu_custom_call.1}
  #allocation0 [shape = 'u32[]', space=smem, size = 0x4, offset = 0x4, fixed_abs, tag = 'smem constant byte address 0x4 - core index']
  #allocation1 [shape = 'u32[144,128]{1,0:T(1,128)}', space=vmem, size = 0x12000, scoped, tag = 'internal scratch']
  #allocation2 [shape = 'f32[16,128]{1,0:T(8,128)}', space=vmem, size = 0x2000, scoped, tag = 'scratch operand']
  %s0 = inlined_call_operand.hbm [shape: bf16[16,32], index: 0, kind: input, shape index: {}]
  %s1 = inlined_call_operand.hbm [shape: bf16[32,128], index: 1, kind: input, shape index: {}]
  %s2 = inlined_call_operand.hbm [shape: bf16[16,128], index: 2, kind: output, shape index: {}]
  %s3 = sld [smem:[#allocation0]]
  $region34: #{tpu_custom_call.1} parent=0
    _
  %s5 = ssub.s32 1, %s3
  %s6 = scalar_select 0, %s5, %s3
  $region1: #{tpu_custom_call.1} parent=0
    #allocation3 [shape = 'u8[4096]{0}', space=vmem, size = 0x1000, scoped, tag = 'input window, operand 0, single buffered']
    #allocation4 [shape = 's32[1]{0}', space=sflag, size = 0x4, scoped, tag = 'scoped memory for tpu_custom_call.1']
    #allocation5 [shape = 's32[1]{0}', space=sflag, size = 0x4, scoped, tag = 'scoped memory for tpu_custom_call.1']
    #allocation6 [shape = 'u8[8192]{0}', space=vmem, size = 0x2000, scoped, tag = 'input window, operand 1, single buffered']
    #allocation7 [shape = 's32[1]{0}', space=sflag, size = 0x4, scoped, tag = 'scoped memory for tpu_custom_call.1']
    #allocation8 [shape = 'u8[4096]{0}', space=vmem, size = 0x1000, scoped, tag = 'output window, operand 0, single buffered']
    %7 = vsyncpa [#allocation4], 0
    %8 = vsyncpa [#allocation7], 0
    %9 = vsyncpa [#allocation5], 0
    // Predicated region
    $region2: #{tpu_custom_call.1} parent=1 // pred_check
      _
    $region3: #{tpu_custom_call.1} parent=1 // pred_check_branch
      %11 = sbr.rel (0) target = $region5
    $region4: #{tpu_custom_call.1} parent=1 // pred_region
      %s13 = ssub.s32 128, 128
      %14 = vsyncadd [#allocation4], %s13
      %s15 = sshll.u32 [#allocation3], 4
      %s16 = int_to_ptr.vmem [resolvable:$true] %s15
      %21 = dma.hbm_to_vmem [thread:$0]  %s0, 128, %s16, [#allocation4], 64, 64, 4
    $region5: #{tpu_custom_call.1} parent=1 // pred_fallthru
      _
    // Predicated region
    $region6: #{tpu_custom_call.1} parent=1 // pred_check
      _
    $region7: #{tpu_custom_call.1} parent=1 // pred_check_branch
      %23 = sbr.rel (0) target = $region9
    $region8: #{tpu_custom_call.1} parent=1 // pred_region
      %s25 = ssub.s32 256, 256
      %26 = vsyncadd [#allocation7], %s25
      %s27 = sshll.u32 [#allocation6], 4
      %s28 = int_to_ptr.vmem [resolvable:$true] %s27
      %33 = dma.hbm_to_vmem [thread:$0]  %s1, 256, %s28, [#allocation7], 64, 64, 4
    $region9: #{tpu_custom_call.1} parent=1 // pred_fallthru
      _
    // Predicated region
    $region10: #{tpu_custom_call.1} parent=1 // pred_check
      _
    $region11: #{tpu_custom_call.1} parent=1 // pred_check_branch
      %35 = sbr.rel (0) target = $region13
    $region12: #{tpu_custom_call.1} parent=1 // pred_region
      %36 = dma.done [#allocation4], 128
    $region13: #{tpu_custom_call.1} parent=1 // pred_fallthru
      _
    // Predicated region
    $region14: #{tpu_custom_call.1} parent=1 // pred_check
      _
    $region15: #{tpu_custom_call.1} parent=1 // pred_check_branch
      %38 = sbr.rel (0) target = $region17
    $region16: #{tpu_custom_call.1} parent=1 // pred_region
      %39 = dma.done [#allocation7], 256
    $region17: #{tpu_custom_call.1} parent=1 // pred_fallthru
      _
    %p41 = scmp.eq.s32.totalorder 0, 0
    // Predicated region
    $region18: #{tpu_custom_call.1} parent=1 // pred_check
      %p42 = pneg %p41
    $region19: #{tpu_custom_call.1} parent=1 // pred_check_branch
      %44 = sbr.rel (%p42) target = $region21
    $region20: #{tpu_custom_call.1} parent=1 // pred_region
      %45 = vst [vmem:[#allocation2] sm:$0xff] 0.0
      %46 = vst [vmem:[#allocation2 + $0x8] sm:$0xff] 0.0
    $region21: #{tpu_custom_call.1} parent=1 // pred_fallthru
      _
    %v47 = vld [vmem:[#allocation2] sm:$0xff]
    %v48 = vld [vmem:[#allocation2 + $0x8] sm:$0xff]
    %v49 = vld [vmem:[#allocation3] sm:$0xf]
    %v50 = vld [vmem:[#allocation3 + $0x4] sm:$0xf]
    %v51 = vld [vmem:[#allocation6] sm:$0xf]
    %v52 = vld [vmem:[#allocation6 + $0x4] sm:$0xf]
    %v53 = vld [vmem:[#allocation6 + $0x8] sm:$0xf]
    %v54 = vld [vmem:[#allocation6 + $0xc] sm:$0xf]
    %v57 = vunpack.c.l.b16 %v49
    %v58 = vunpack.c.l.b16 %v50
    %v59 = vpack.c.b16 %v58, %v57
    %v64 = vunpack.c.l.b16 %v51
    %v65 = vunpack.c.l.b16 %v52
    %v66 = vunpack.c.l.b16 %v53
    %v67 = vunpack.c.l.b16 %v54
    %v68 = vpack.c.b16 %v65, %v64
    %v69 = vpack.c.b16 %v67, %v66
    %vm72 = vcmask 261120
    %v74 = vsel %vm72, %v59, 0
    %76 = vmatprep.subr.bf16.mxu0 0
    %77 = vmatpush1.bf16.msra.mxu0 %v68
    %78 = vmatprep.subr.bf16.mxu0 0
    %79 = vmatpush1.bf16.msra.mxu0 %v69
    %80 = vmatprep.subr.bf16.mxu0 0
    %81 = vmatpush1.bf16.msra.mxu0 0
    %82 = vmatprep.subr.bf16.mxu0 0
    %83 = vmatpush1.bf16.msra.mxu0 0
    %84 = vmatprep.subr.bf16.mxu0 0
    %85 = vmatpush1.bf16.msra.mxu0 0
    %86 = vmatprep.subr.bf16.mxu0 0
    %87 = vmatpush1.bf16.msra.mxu0 0
    %88 = vmatprep.subr.bf16.mxu0 0
    %89 = vmatpush1.bf16.msra.mxu0 0
    %90 = vmatprep.subr.bf16.mxu0 0
    %91 = vmatpush1.bf16.msra.mxu0 0
    %92 = vmatprep.subr.bf16.mxu0 0
    %93 = vmatpush1.bf16.msra.mxu0 0
    %94 = vmatprep.subr.bf16.mxu0 0
    %95 = vmatpush1.bf16.msra.mxu0 0
    %96 = vmatprep.subr.bf16.mxu0 0
    %97 = vmatpush1.bf16.msra.mxu0 0
    %98 = vmatprep.subr.bf16.mxu0 0
    %99 = vmatpush1.bf16.msra.mxu0 0
    %100 = vmatprep.subr.bf16.mxu0 0
    %101 = vmatpush1.bf16.msra.mxu0 0
    %102 = vmatprep.subr.bf16.mxu0 0
    %103 = vmatpush1.bf16.msra.mxu0 0
    %104 = vmatprep.subr.bf16.mxu0 0
    %105 = vmatpush1.bf16.msra.mxu0 0
    %106 = vmatprep.subr.bf16.mxu0 0
    %107 = vmatpush1.bf16.msra.mxu0 0
    %108 = vmatprep.mubr.bf16.mxu0 0
    %109 = vmatmul.mubr.bf16.gmra.mrb[0].mxu0 %v74
    %v110 = vpop.f32.mrb[0].mxu0
    %v111 = vadd.f32 0.0, %v110
    %v112 = vpop.f32.mrb[0].mxu0
    %v113 = vpop.f32.mrb[0].mxu0
    %v114 = vadd.f32 0.0, %v113
    %v115 = vpop.f32.mrb[0].mxu0
    %116 = vdwg.mxu0
    %v117 = vadd.f32 %v47, %v111
    %v118 = vadd.f32 %v48, %v114
    %119 = vst [vmem:[#allocation2] sm:$0xff] %v117
    %120 = vst [vmem:[#allocation2 + $0x8] sm:$0xff] %v118
    // Predicated region
    $region22: #{tpu_custom_call.1} parent=1 // pred_check
      %p121 = pneg %p41
    $region23: #{tpu_custom_call.1} parent=1 // pred_check_branch
      %123 = sbr.rel (%p121) target = $region25
    $region24: #{tpu_custom_call.1} parent=1 // pred_region
      %v124 = vld [vmem:[#allocation2] sm:$0xff]
      %v125 = vld [vmem:[#allocation2 + $0x8] sm:$0xff]
      %v126 = vpack.c.bf16 %v125, %v124
      %v128 = vunpack.c.l.b16 %v126
      %v129 = vunpack.c.h.b16 %v126
      %v130 = vpack.c.b16 %v128, %v128
      %v131 = vpack.c.b16 %v129, %v129
      %134 = vst [vmem:[#allocation8] sm:$0xf] %v130
      %135 = vst [vmem:[#allocation8 + $0x4] sm:$0xf] %v131
    $region25: #{tpu_custom_call.1} parent=1 // pred_fallthru
      _
    // Predicated region
    $region26: #{tpu_custom_call.1} parent=1 // pred_check
      _
    $region27: #{tpu_custom_call.1} parent=1 // pred_check_branch
      %137 = sbr.rel (0) target = $region29
    $region28: #{tpu_custom_call.1} parent=1 // pred_region
      %s139 = ssub.s32 128, 128
      %140 = vsyncadd [#allocation5], %s139
      %s141 = sshll.u32 [#allocation8], 4
      %s142 = int_to_ptr.vmem [resolvable:$true] %s141
      %147 = dma.vmem_to_hbm [thread:$0]  %s142, 128, %s2, [#allocation5], 64, 64, 4
    $region29: #{tpu_custom_call.1} parent=1 // pred_fallthru
      _
    // Predicated region
    $region30: #{tpu_custom_call.1} parent=1 // pred_check
      _
    $region31: #{tpu_custom_call.1} parent=1 // pred_check_branch
      %149 = sbr.rel (0) target = $region33
    $region32: #{tpu_custom_call.1} parent=1 // pred_region
      %150 = dma.done [#allocation5], 128
    $region33: #{tpu_custom_call.1} parent=1 // pred_fallthru
      _
    %151 = vsyncpa [#allocation4], 1
    %152 = vsyncpa [#allocation7], 1
    %153 = vsyncpa [#allocation5], 1

</llo_original>
